<compile_context>
chip_gen: v7x
topology: tpu7x:2x2x1
jax: 0.10.0
libtpu: 0.0.40
codegen_flags: <defaults>
</compile_context>

<pallas_src>
import jax
import jax.numpy as jnp
from jax.experimental import pallas as pl
from jax.experimental.pallas import tpu as pltpu

# --- deterministic "parameters" from __init__ (unused by this loss path) ----
LOSS_TERM_NUM = 6                                  # cfg.MODEL.STEREO.LOSS_TERM_NUM
LOSS_TERM_UNCERT = jnp.full((LOSS_TERM_NUM,), -1.0, dtype=jnp.float32)  # init constant_(-1.0)
PLANAR_DEPTH_LOSS_WEIGHT = 1.0                     # cfg.MODEL.STEREO.PLANAR_DEPTH_LOSS_WEIGHT
FT_DET_LOSS_WEIGHT = 0.5                           # cfg.MODEL.STEREO.FINETUNE_DET_LOSS_WEIGHT


def _pick_spatial_tile(P, max_tile=16384):
    """Largest multiple of 128 that divides P and is <= max_tile (v7x-safe)."""
    assert P % 128 == 0, "H*W must be a multiple of 128 for the lane axis"
    best, t, limit = 128, 128, min(P, max_tile)
    while t <= limit:
        if P % t == 0:
            best = t
        t += 128
    return best


# ----------------------------- pass 1 ---------------------------------------
def _pool_kernel(plane_ref, mask_ref, stat_ref):
    """Accumulate per-instance pooled (-plane) sums + mask pixel counts.

    plane_ref: (1, 3, T) f32      mask_ref: (1, N, T) int8
    stat_ref : (1, N, 4) f32  accumulator across P-tiles
                col 0..2 = sum_masked(-plane), col 3 = mask pixel count
    """
    @pl.when(pl.program_id(1) == 0)
    def _init():
        stat_ref[...] = jnp.zeros_like(stat_ref)

    neg_plane = -plane_ref[0]                                  # [3, T]
    masks = mask_ref[0].astype(jnp.float32)                    # [N, T]
    ones = jnp.ones((1, neg_plane.shape[-1]), jnp.float32)
    aug = jnp.concatenate([neg_plane, ones], axis=0)           # [4, T]
    # Count folded into the pooling matmul (contraction over the full tile).
    nc = jnp.einsum('np,cp->nc', masks, aug,
                    preferred_element_type=jnp.float32)        # [N, 4]
    stat_ref[0] = stat_ref[0] + nc


# ----------------------------- pass 2 ---------------------------------------
def _depth_kernel(par_ref, plane_ref, mask_ref, cam_ref, tgt_ref,
                  depth_ref, stat_ref):
    """Per-tile planar depth + masked-L1 partial sums.

    par_ref  : (1, N, 4) f32   cols 0..2 = instance plane params, col 3 = max depth
    plane_ref: (1, 3, T) f32   mask_ref: (1, N, T) int8
    cam_ref  : (1, 3, T) f32   tgt_ref : (1, 1, T) f32
    depth_ref: (1, 1, T) f32   stat_ref: (1, 1, 2, 128) f32 (sum|err|, valid count)
    """
    par = par_ref[0]                                           # [N, 4]
    plane = plane_ref[0]                                       # [3, T]
    cam = cam_ref[0]                                           # [3, T]
    tgt = tgt_ref[0]                                           # [1, T]
    masks = mask_ref[0].astype(jnp.float32)                    # [N, T]

    neg_plane = -plane
    # pixel-wise planar depth: 1 / sum(-plane * cam, ch)
    den_pix = jnp.sum(neg_plane * cam, axis=0, keepdims=True)  # [1, T]
    pixel_depth = pl.reciprocal(den_pix, approx=True)

    # per-instance planar depth via 3 VPU broadcast-FMAs (no K=3 MXU matmul)
    den_ins = (par[:, 0:1] * cam[0:1, :]
               + par[:, 1:2] * cam[1:2, :]
               + par[:, 2:3] * cam[2:3, :])                    # [N, T]
    piece = pl.reciprocal(den_ins, approx=True) * masks
    piece = jnp.where(piece < 1e-4, 1e4, piece)
    min_piece = jnp.min(piece, axis=0, keepdims=True)          # [1, T]

    plane_mask_f = (jnp.sum(masks, axis=0, keepdims=True) > 0.0
                    ).astype(jnp.float32)                      # [1, T]
    depth = min_piece * plane_mask_f + pixel_depth * (1.0 - plane_mask_f)

    maxd = par[0:1, 3:4]                                       # (1, 1) per-image max depth
    depth = jnp.maximum(jnp.minimum(depth, maxd), 0.5)
    depth_ref[0] = depth

    valid = (tgt > 1e-4).astype(jnp.float32)
    abs_err = jnp.abs(depth - tgt) * valid
    stat_ref[0, 0] = jnp.concatenate(
        [jnp.full((1, 128), jnp.sum(abs_err), dtype=jnp.float32),
         jnp.full((1, 128), jnp.sum(valid), dtype=jnp.float32)], axis=0)


# ----------------------------- wrapper ---------------------------------------
def instance_planar_depth_loss(pred_plane_map, gt_masks, camera_grid,
                               target_depth, weight=PLANAR_DEPTH_LOSS_WEIGHT):
    """Pallas wrapper for PlaneStereo_Finetune.get_instance_plane_depth_loss."""
    B, C, H, W = pred_plane_map.shape
    N = gt_masks.shape[1]
    P = H * W
    TILE = _pick_spatial_tile(P)
    T = P // TILE

    plane = pred_plane_map.reshape(B, C, P).astype(jnp.float32)
    cam = camera_grid.reshape(B, C, P).astype(jnp.float32)
    tgt = target_depth.reshape(B, 1, P).astype(jnp.float32)
    masks_i8 = gt_masks.reshape(B, N, P).astype(jnp.int8)      # narrow HBM stream

    # ---- pass 1: per-image instance pooling (accumulated over P tiles) ----
    stats1 = pl.pallas_call(
        _pool_kernel,
        out_shape=jax.ShapeDtypeStruct((B, N, 4), jnp.float32),
        grid_spec=pltpu.PrefetchScalarGridSpec(
            num_scalar_prefetch=0,
            grid=(B, T),
            in_specs=[
                pl.BlockSpec((1, C, TILE), lambda b, t: (b, 0, t)),
                pl.BlockSpec((1, N, TILE), lambda b, t: (b, 0, t)),
            ],
            out_specs=pl.BlockSpec((1, N, 4), lambda b, t: (b, 0, 0)),
        ),
        compiler_params=pltpu.CompilerParams(
            dimension_semantics=("parallel", "arbitrary"),
            vmem_limit_bytes=32 * 1024 * 1024),
    )(plane, masks_i8)

    pooled = stats1[:, :, 0:3]                                  # [B, N, 3]
    counts = stats1[:, :, 3:4]                                  # [B, N, 1]
    # maximum() guards the degenerate empty-mask case (no-op for non-empty masks).
    ins_planes = pooled / jnp.maximum(counts, 1e-6)             # [B, N, 3]
    max_depth = jnp.max(tgt.reshape(B, P), axis=-1)             # [B]
    params = jnp.concatenate(
        [ins_planes, jnp.broadcast_to(max_depth[:, None, None], (B, N, 1))],
        axis=-1).astype(jnp.float32)                            # [B, N, 4]

    # ---- pass 2: per-tile depth + masked-L1 partials (both axes parallel) --
    depth, stats2 = pl.pallas_call(
        _depth_kernel,
        out_shape=(
            jax.ShapeDtypeStruct((B, 1, P), jnp.float32),       # planar depth
            jax.ShapeDtypeStruct((B, T, 2, 128), jnp.float32),  # per-tile partials
        ),
        grid_spec=pltpu.PrefetchScalarGridSpec(
            num_scalar_prefetch=0,
            grid=(B, T),
            in_specs=[
                pl.BlockSpec((1, N, 4), lambda b, t: (b, 0, 0)),
                pl.BlockSpec((1, C, TILE), lambda b, t: (b, 0, t)),
                pl.BlockSpec((1, N, TILE), lambda b, t: (b, 0, t)),
                pl.BlockSpec((1, C, TILE), lambda b, t: (b, 0, t)),
                pl.BlockSpec((1, 1, TILE), lambda b, t: (b, 0, t)),
            ],
            out_specs=[
                pl.BlockSpec((1, 1, TILE), lambda b, t: (b, 0, t)),
                pl.BlockSpec((1, 1, 2, 128), lambda b, t: (b, t, 0, 0)),
            ],
        ),
        compiler_params=pltpu.CompilerParams(
            dimension_semantics=("parallel", "parallel"),
            vmem_limit_bytes=32 * 1024 * 1024),
    )(params, plane, masks_i8, cam, tgt)

    # glue: batch-wide mean over valid pixels (matches torch.mean over the
    # boolean-masked tensor), times the configured loss weight.
    loss = (jnp.sum(stats2[:, :, 0, 0]) / jnp.sum(stats2[:, :, 1, 0])) * weight
    pred_depth_maps = depth.reshape(B, H, W)
    return {'loss_instance_planar_depth': loss}, pred_depth_maps


# ----------------------------- reference -------------------------------------
def _reference(pred_plane_map, gt_masks, camera_grid, target_depth, weight):
    """Plain-JAX reference replicating the PyTorch math."""
    B, C, H, W = pred_plane_map.shape
    preds = []
    for b in range(B):
        pm = pred_plane_map[b].reshape(C, -1)
        ms = gt_masks[b].reshape(gt_masks.shape[1], -1)
        cg = camera_grid[b].reshape(C, -1)
        ins = (-(ms @ pm.T)) / ms.sum(-1, keepdims=True)
        piece = 1.0 / (ins @ cg)
        pixel = 1.0 / jnp.sum(-pm * cg, axis=0)
        pmask = ms.sum(0) > 0
        piece = piece * ms
        piece = jnp.where(piece < 1e-4, 1e4, piece)
        d = jnp.min(piece, axis=0) * pmask + pixel * (~pmask)
        d = jnp.clip(d, 0.5, jnp.max(target_depth[b]))
        preds.append(d.reshape(H, W))
    preds = jnp.stack(preds)
    valid = target_depth > 1e-4
    loss = jnp.sum(jnp.abs(preds - target_depth) * valid) / jnp.sum(valid) * weight
    return loss, preds


if __name__ == "__main__":
    key = jax.random.PRNGKey(0)
    k1, k2, k3, k4 = jax.random.split(key, 4)

    B, H, W, N = 2, 16, 16, 4   # batch, spatial, instances per image

    # pred_plane_map = -(n/d): small xy components, dominant z component
    nxy = jax.random.uniform(k1, (B, 2, H, W), minval=-0.05, maxval=0.05)
    nz = jax.random.uniform(k2, (B, 1, H, W), minval=0.2, maxval=0.4)
    pred_plane_map = -jnp.concatenate([nxy, nz], axis=1)            # [B, 3, H, W]

    # camera ray grid [x, y, 1]
    cam_xy = jax.random.uniform(k3, (B, 2, H, W), minval=-0.3, maxval=0.3)
    camera_grid = jnp.concatenate(
        [cam_xy, jnp.ones((B, 1, H, W), jnp.float32)], axis=1)      # [B, 3, H, W]

    # binary gt instance masks (3.5 quadrants covered; some pixels unmasked)
    hh, ww = H // 2, W // 2
    gt_masks = jnp.zeros((B, N, H, W), jnp.float32)
    gt_masks = gt_masks.at[:, 0, :hh, :ww].set(1.0)
    gt_masks = gt_masks.at[:, 1, :hh, ww:].set(1.0)
    gt_masks = gt_masks.at[:, 2, hh:, :ww].set(1.0)
    gt_masks = gt_masks.at[:, 3, hh:, ww:ww + ww // 2].set(1.0)

    target_depth = jax.random.uniform(k4, (B, H, W), minval=1.0, maxval=4.0)

    loss_dict, pred_depth = instance_planar_depth_loss(
        pred_plane_map, gt_masks, camera_grid, target_depth)
    jax.block_until_ready(loss_dict['loss_instance_planar_depth'])
    jax.block_until_ready(pred_depth)

    ref_loss, ref_depth = _reference(
        pred_plane_map, gt_masks, camera_grid, target_depth,
        PLANAR_DEPTH_LOSS_WEIGHT)

    # Tolerance accounts for pl.reciprocal(approx=True) on the EUP.
    assert jnp.allclose(pred_depth, ref_depth, rtol=1e-2, atol=1e-2), "depth mismatch"
    assert jnp.allclose(loss_dict['loss_instance_planar_depth'], ref_loss,
                        rtol=1e-2, atol=1e-2), "loss mismatch"

    print("KERNEL_OK")
</pallas_src>

<mosaic_0001>
module attributes {stable_mosaic.version = 11 : i64} {
  func.func @_pool_kernel(%arg0: i32, %arg1: i32, %arg2: memref<1x3x256xf32, #tpu.memory_space<vmem>>, %arg3: memref<1x4x256xi8, #tpu.memory_space<vmem>>, %arg4: memref<1x4x4xf32, #tpu.memory_space<vmem>>) attributes {dimension_semantics = [#tpu.dimension_semantics<parallel>, #tpu.dimension_semantics<arbitrary>], iteration_bounds = array<i64: 2, 1>, scalar_prefetch = 0 : i64, scratch_operands = 0 : i64, tpu.core_type = #tpu.core_type<tc>, window_params = [{transform_indices = @transform_0, window_bounds = array<i64: 1, 3, 256>}, {transform_indices = @transform_1, window_bounds = array<i64: 1, 4, 256>}, {transform_indices = @transform_2, window_bounds = array<i64: 1, 4, 4>}]} {
    %c0_i32 = arith.constant 0 : i32
    %0 = arith.cmpi eq, %arg1, %c0_i32 : i32
    %1 = arith.extui %0 : i1 to i32
    %c0_i32_0 = arith.constant 0 : i32
    %2 = arith.cmpi ne, %1, %c0_i32_0 : i32
    scf.if %2 {
      %cst_14 = arith.constant 0.000000e+00 : f32
      %19 = vector.broadcast %cst_14 : f32 to vector<1x4x4xf32>
      %c0_15 = arith.constant 0 : index
      %c0_16 = arith.constant 0 : index
      %c0_17 = arith.constant 0 : index
      %20 = vector.load %arg4[%c0_15, %c0_16, %c0_17] : memref<1x4x4xf32, #tpu.memory_space<vmem>>, vector<1x4x4xf32>
      tpu.vector_store %arg4[%c0_15, %c0_16, %c0_17], %19 {strides = array<i32>} : memref<1x4x4xf32, #tpu.memory_space<vmem>>, vector<1x4x4xf32>,
    } else {
    }
    %c0 = arith.constant 0 : index
    %c0_1 = arith.constant 0 : index
    %c0_2 = arith.constant 0 : index
    %3 = vector.load %arg2[%c0, %c0_1, %c0_2] : memref<1x3x256xf32, #tpu.memory_space<vmem>>, vector<1x3x256xf32>
    %4 = vector.shape_cast %3 : vector<1x3x256xf32> to vector<3x256xf32>
    %cst = arith.constant 0.000000e+00 : f32
    %5 = vector.broadcast %cst : f32 to vector<3x256xf32>
    %6 = arith.subf %5, %4 : vector<3x256xf32>
    %c0_3 = arith.constant 0 : index
    %c0_4 = arith.constant 0 : index
    %c0_5 = arith.constant 0 : index
    %7 = vector.load %arg3[%c0_3, %c0_4, %c0_5] : memref<1x4x256xi8, #tpu.memory_space<vmem>>, vector<1x4x256xi8>
    %8 = vector.shape_cast %7 : vector<1x4x256xi8> to vector<4x256xi8>
    %9 = arith.sitofp %8 : vector<4x256xi8> to vector<4x256xf32>
    %cst_6 = arith.constant 1.000000e+00 : f32
    %10 = vector.broadcast %cst_6 : f32 to vector<1x256xf32>
    %11 = tpu.concatenate %6, %10 in 0 : vector<3x256xf32>, vector<1x256xf32> -> vector<4x256xf32>
    "tpu.trace_start"() <{level = 10 : i32, message = "np,cp->nc"}> : () -> ()
    %cst_7 = arith.constant dense<0.000000e+00> : vector<4x4xf32>
    %12 = tpu.matmul %9, %11, %cst_7 {dimension_numbers = #tpu.dot_dimension_numbers<[1], [1], [0], [0], [0, 0, 1, 0], [], []>} : vector<4x256xf32>, vector<4x256xf32>, vector<4x4xf32> -> vector<4x4xf32>
    "tpu.trace_stop"() : () -> ()
    %c0_8 = arith.constant 0 : index
    %c0_9 = arith.constant 0 : index
    %c0_10 = arith.constant 0 : index
    %13 = vector.load %arg4[%c0_8, %c0_9, %c0_10] : memref<1x4x4xf32, #tpu.memory_space<vmem>>, vector<1x4x4xf32>
    %14 = vector.shape_cast %13 : vector<1x4x4xf32> to vector<4x4xf32>
    %15 = arith.addf %14, %12 : vector<4x4xf32>
    %c0_11 = arith.constant 0 : index
    %c0_12 = arith.constant 0 : index
    %c0_13 = arith.constant 0 : index
    %16 = vector.load %arg4[%c0_11, %c0_12, %c0_13] : memref<1x4x4xf32, #tpu.memory_space<vmem>>, vector<1x4x4xf32>
    %17 = vector.shape_cast %16 : vector<1x4x4xf32> to vector<4x4xf32>
    %18 = vector.shape_cast %15 : vector<4x4xf32> to vector<1x4x4xf32>
    tpu.vector_store %arg4[%c0_11, %c0_12, %c0_13], %18 {strides = array<i32>} : memref<1x4x4xf32, #tpu.memory_space<vmem>>, vector<1x4x4xf32>,
    return
  }
  func.func @transform_0(%arg0: i32, %arg1: i32) -> (i32, i32, i32) {
    %c0_i32 = arith.constant 0 : i32
    %c0_i32_0 = arith.constant 0 : i32
    return %arg0, %c0_i32, %arg1 : i32, i32, i32
  }
  func.func @transform_1(%arg0: i32, %arg1: i32) -> (i32, i32, i32) {
    %c0_i32 = arith.constant 0 : i32
    %c0_i32_0 = arith.constant 0 : i32
    return %arg0, %c0_i32, %arg1 : i32, i32, i32
  }
  func.func @transform_2(%arg0: i32, %arg1: i32) -> (i32, i32, i32) {
    %c0_i32 = arith.constant 0 : i32
    %c0_i32_0 = arith.constant 0 : i32
    %c0_i32_1 = arith.constant 0 : i32
    return %arg0, %c0_i32, %c0_i32_0 : i32, i32, i32
  }
}

</mosaic_0001>

<llo_original>
// kernel: tpu_custom_call.1
$region0: #{tpu_custom_call.1}
  #allocation0 [shape = 'u32[]', space=smem, size = 0x4, offset = 0x4, fixed_abs, tag = 'smem constant byte address 0x4 - core index']
  #allocation1 [shape = 'u32[144,128]{1,0:T(1,128)}', space=vmem, size = 0x12000, scoped, tag = 'internal scratch']
  %s0 = inlined_call_operand.vmem [shape: f32[2,3,256], index: 0, kind: input, shape index: {}]
  %s1 = inlined_call_operand.vmem [shape: s8[2,4,256], index: 1, kind: input, shape index: {}]
  %s2 = inlined_call_operand.hbm [shape: f32[2,4,4], index: 2, kind: output, shape index: {}]
  %s3 = sld [smem:[#allocation0]]
  $region45: #{tpu_custom_call.1} parent=0
    _
  %s5 = ssub.s32 1, %s3
  %s6 = scalar_select 0, %s5, %s3
  $region1: #{tpu_custom_call.1} parent=0
    #allocation2 [shape = 'u8[4096]{0}', space=vmem, size = 0x1000, scoped, tag = 'output window, operand 0']
    #allocation3 [shape = 's32[2]{0}', space=sflag, size = 0x8, scoped, tag = 'scoped memory for tpu_custom_call.1']
    %7 = vsyncpa [#allocation3], 0
    %s8 = scalar_lea.sflag [#allocation3], 1
    %9 = vsyncpa %s8, 0
    loop: start=0, step=1, limit=4
    $region2: #{tpu_custom_call.1} parent=1 // loop_pre_header
      _
    $region3: #{tpu_custom_call.1} parent=1 // loop_header
      %s11 = sphi 0, %s15
      %p12 = scmp.ge.s32.totalorder %s11, 4
      %s18 = sphi 0, %s30
      %s19 = sphi 0, %s26
      %s20 = sphi 0, %s18
      %s21 = sphi 0, %s19
      %s22 = sphi 0, %s20
      %s23 = sphi 0, %s21
      %s35 = sphi 0, %s37
      %s38 = sphi 0, %s35
      %s39 = sphi 0, %s38
      %s55 = sphi 0, %s39
      %s63 = sphi 0, %s65
      %s66 = sphi 0, %s63
      %s67 = sphi 0, %s66
      %s83 = sphi 0, %s67
      %s89 = sphi 0, %s91
      %s92 = sphi 0, %s89
      %s93 = sphi 0, %s92
      %s109 = sphi 0, %s93
    $region4: #{tpu_custom_call.1} parent=1 // loop_header_branch
      %14 = sbr.rel (%p12) target = $region8
    $region5: #{tpu_custom_call.1} parent=1 // loop_body
      %s16 = ssub.s32 %s11, 1
      %s17 = ssub.s32 %s11, 2
      %s24 = sadd.s32 1, %s19
      %p25 = scmp.ge.s32.totalorder %s24, 1
      %s26 = scalar_select %p25, 0, %s24
      %s27 = sadd.s32 1, %s18
      %s28 = scalar_select %p25, %s27, %s18
      %p29 = scmp.ge.s32.totalorder %s28, 2
      %s30 = scalar_select %p29, 0, %s28
      %s31 = ssub.s32 %s18, %s30
      %s32 = ssub.s32 %s19, %s26
      %s33 = sor.u32 %s31, %s32
      %p34 = scmp.eq.s32.totalorder %s33, 0
      %s36 = sadd.s32 %s35, 1
      %s37 = scalar_select %p34, %s35, %s36
      %p40 = pneg %p34
      %p41 = scmp.eq.s32.totalorder %s11, 1
      %p42 = por %p40, %p41
      %p43 = scmp.ne.s32.totalorder %s35, %s38
      %p44 = scmp.eq.s32.totalorder %s11, 0
      %p45 = por %p43, %p44
      %p46 = scmp.ne.s32.totalorder %s35, %s38
      %p47 = scmp.eq.s32.totalorder %s16, 1
      %p48 = por %p46, %p47
      %p49 = scmp.ne.s32.totalorder %s38, %s39
      %p50 = scmp.eq.s32.totalorder %s16, 0
      %p51 = por %p49, %p50
      %p52 = scmp.ne.s32.totalorder %s38, %s39
      %p53 = scmp.eq.s32.totalorder %s17, 1
      %p54 = por %p52, %p53
      %p56 = scmp.ne.s32.totalorder %s39, %s55
      %p57 = scmp.eq.s32.totalorder %s17, 0
      %p58 = por %p56, %p57
      %s59 = ssub.s32 %s18, %s30
      %s60 = ssub.s32 %s19, %s26
      %s61 = sor.u32 %s59, %s60
      %p62 = scmp.eq.s32.totalorder %s61, 0
      %s64 = sadd.s32 %s63, 1
      %s65 = scalar_select %p62, %s63, %s64
      %p68 = pneg %p62
      %p69 = scmp.eq.s32.totalorder %s11, 1
      %p70 = por %p68, %p69
      %p71 = scmp.ne.s32.totalorder %s63, %s66
      %p72 = scmp.eq.s32.totalorder %s11, 0
      %p73 = por %p71, %p72
      %p74 = scmp.ne.s32.totalorder %s63, %s66
      %p75 = scmp.eq.s32.totalorder %s16, 1
      %p76 = por %p74, %p75
      %p77 = scmp.ne.s32.totalorder %s66, %s67
      %p78 = scmp.eq.s32.totalorder %s16, 0
      %p79 = por %p77, %p78
      %p80 = scmp.ne.s32.totalorder %s66, %s67
      %p81 = scmp.eq.s32.totalorder %s17, 1
      %p82 = por %p80, %p81
      %p84 = scmp.ne.s32.totalorder %s67, %s83
      %p85 = scmp.eq.s32.totalorder %s17, 0
      %p86 = por %p84, %p85
      %s87 = ssub.s32 %s18, %s30
      %p88 = scmp.eq.s32.totalorder %s87, 0
      %s90 = sadd.s32 %s89, 1
      %s91 = scalar_select %p88, %s89, %s90
      %p94 = pneg %p88
      %p95 = scmp.eq.s32.totalorder %s11, 1
      %p96 = por %p94, %p95
      %p97 = scmp.ne.s32.totalorder %s89, %s92
      %p98 = scmp.eq.s32.totalorder %s11, 0
      %p99 = por %p97, %p98
      %p100 = scmp.ne.s32.totalorder %s89, %s92
      %p101 = scmp.eq.s32.totalorder %s16, 1
      %p102 = por %p100, %p101
      %p103 = scmp.ne.s32.totalorder %s92, %s93
      %p104 = scmp.eq.s32.totalorder %s16, 0
      %p105 = por %p103, %p104
      %p106 = scmp.ne.s32.totalorder %s92, %s93
      %p107 = scmp.eq.s32.totalorder %s17, 1
      %p108 = por %p106, %p107
      %p110 = scmp.ne.s32.totalorder %s93, %s109
      %p111 = scmp.eq.s32.totalorder %s17, 0
      %p112 = por %p110, %p111
      %p113 = scmp.le.s32.totalorder 1, %s11
      %p114 = scmp.lt.s32.totalorder %s11, 3
      %p115 = pnand %p113, %p114
      %p116 = pneg %p115
      // Predicated region
      $region9: #{tpu_custom_call.1} parent=5 // pred_check
        _
      $region10: #{tpu_custom_call.1} parent=5 // pred_check_branch
        %118 = sbr.rel (%p115) target = $region12
      $region11: #{tpu_custom_call.1} parent=5 // pred_region
        %s119 = ssub.s32 %s11, 1
      $region12: #{tpu_custom_call.1} parent=5 // pred_fallthru
        _
      %p120 = scmp.lt.s32.totalorder %s11, 2
      // Predicated region
      $region13: #{tpu_custom_call.1} parent=5 // pred_check
        %p121 = pneg %p120
      $region14: #{tpu_custom_call.1} parent=5 // pred_check_branch
        %123 = sbr.rel (%p121) target = $region16
      $region15: #{tpu_custom_call.1} parent=5 // pred_region
        // Predicated region
        $region17: #{tpu_custom_call.1} parent=15 // pred_check
          %p124 = pneg %p45
        $region18: #{tpu_custom_call.1} parent=15 // pred_check_branch
          %126 = sbr.rel (%p124) target = $region20
        $region19: #{tpu_custom_call.1} parent=15 // pred_region
          %s127 = smul.u32 2, %s19
          %p128 = scmp.lt.s32.totalorder %s18, 1
          %s129 = scalar_select %p128, %s18, 1
          %p130 = scmp.lt.s32.totalorder %s127, 1
          %s131 = scalar_select %p130, %s127, 1
          %s132 = smul.addr %s129, 2
          %s133 = sadd.s32 %s131, %s132
          %s134 = smul.addr %s133, 4
          %s135 = scalar_lea.vmem %s0, %s134
          %s136 = smul.u32 2, %s19
        $region20: #{tpu_custom_call.1} parent=15 // pred_fallthru
          _
        // Predicated region
        $region21: #{tpu_custom_call.1} parent=15 // pred_check
          %p137 = pneg %p73
        $region22: #{tpu_custom_call.1} parent=15 // pred_check_branch
          %139 = sbr.rel (%p137) target = $region24
        $region23: #{tpu_custom_call.1} parent=15 // pred_region
          %s140 = smul.u32 2, %s19
          %p141 = scmp.lt.s32.totalorder %s18, 1
          %s142 = scalar_select %p141, %s18, 1
          %p143 = scmp.lt.s32.totalorder %s140, 1
          %s144 = scalar_select %p143, %s140, 1
          %s145 = smul.addr %s142, 2
          %s146 = sadd.s32 %s144, %s145
          %s147 = scalar_lea.vmem %s1, %s146
          %s148 = smul.u32 2, %s19
        $region24: #{tpu_custom_call.1} parent=15 // pred_fallthru
          _
      $region16: #{tpu_custom_call.1} parent=5 // pred_fallthru
        _
      %p149 = scmp.le.s32.totalorder 1, %s11
      %p150 = scmp.lt.s32.totalorder %s11, 3
      %p151 = pnand %p149, %p150
      %p152 = pneg %p151
      // Predicated region
      $region25: #{tpu_custom_call.1} parent=5 // pred_check
        _
      $region26: #{tpu_custom_call.1} parent=5 // pred_check_branch
        %154 = sbr.rel (%p151) target = $region28
      $region27: #{tpu_custom_call.1} parent=5 // pred_region
        %s155 = ssub.s32 %s11, 1
        %s156 = smul.u32 2, %s21
        %p157 = scmp.lt.s32.totalorder %s20, 1
        %s158 = scalar_select %p157, %s20, 1
        %p159 = scmp.lt.s32.totalorder %s156, 1
        %s160 = scalar_select %p159, %s156, 1
        %s161 = smul.addr %s158, 2
        %s162 = sadd.s32 %s160, %s161
        %s163 = smul.addr %s162, 4
        %s164 = scalar_lea.vmem %s0, %s163
        %p165 = pneg %p51
        %p166 = pneg %p48
        %s167 = smul.u32 2, %s21
        %p168 = scmp.lt.s32.totalorder %s20, 1
        %s169 = scalar_select %p168, %s20, 1
        %p170 = scmp.lt.s32.totalorder %s167, 1
        %s171 = scalar_select %p170, %s167, 1
        %s172 = smul.addr %s169, 2
        %s173 = sadd.s32 %s171, %s172
        %s174 = scalar_lea.vmem %s1, %s173
        %p175 = pneg %p79
        %p176 = pneg %p76
        %p177 = pneg %p105
        %p178 = pneg %p102
        %s179 = sand.u32 %s92, 1
        %s180 = scalar_lea.sflag [#allocation3], %s179
        %s181 = sand.u32 %s92, 1
        %s182 = smul.addr %s181, 4
        %s183 = scalar_lea.vmem [#allocation2], %s182
        %s184 = smul.u32 2, %s21
        %p185 = scmp.lt.s32.totalorder %s20, 1
        %s186 = scalar_select %p185, %s20, 1
        %p187 = scmp.lt.s32.totalorder %s184, 1
        %s188 = scalar_select %p187, %s184, 1
        %s189 = smul.addr %s186, 2
        %s190 = sadd.s32 %s188, %s189
        %s191 = smul.addr %s190, 4
        %s192 = scalar_lea.vmem %s0, %s191
        %s193 = smul.u32 2, %s21
        %s194 = smul.u32 2, %s21
        %p195 = scmp.lt.s32.totalorder %s20, 1
        %s196 = scalar_select %p195, %s20, 1
        %p197 = scmp.lt.s32.totalorder %s194, 1
        %s198 = scalar_select %p197, %s194, 1
        %s199 = smul.addr %s196, 2
        %s200 = sadd.s32 %s198, %s199
        %s201 = scalar_lea.vmem %s1, %s200
        %s202 = smul.u32 2, %s21
        %p203 = scmp.eq.s32.totalorder %s21, 0
        // Predicated region
        $region29: #{tpu_custom_call.1} parent=27 // pred_check
          %p204 = pneg %p203
        $region30: #{tpu_custom_call.1} parent=27 // pred_check_branch
          %206 = sbr.rel (%p204) target = $region32
        $region31: #{tpu_custom_call.1} parent=27 // pred_region
          %vm207 = vcmask 27648
          %208 = vst.msk [vmem:[%s183] sm:$0xf] %vm207, 0.0
        $region32: #{tpu_custom_call.1} parent=27 // pred_fallthru
          _
        %v209 = vld [vmem:[%s192] sm:$0x77]
        %v210 = vsub.f32 0.0, %v209
        %v211 = vld [vmem:[%s201] sm:$0x3]
        %v212 = vunpack.c.0.s8 %v211
        %v213 = vcvt.s32.f32 %v212
        %v215 = vcombine.high %v210, %v210
        %vm217 = vcmask 1042432
        %v218 = vsel %vm217, %v210, 1.0
        %v219 = vsel %vm217, %v215, 1.0
        %v221 = vcombine.high %v213, %v213
        %223 = vmatprep.subr.mxu0 %v219
        %224 = vmatpush1.xpose.msra.mxu0 %v218
        %225 = vmatprep.subr.mxu0 0.0
        %226 = vmatpush1.xpose.msra.mxu0 0.0
        %227 = vmatprep.subr.mxu0 0.0
        %228 = vmatpush1.xpose.msra.mxu0 0.0
        %229 = vmatprep.subr.mxu0 0.0
        %230 = vmatpush1.xpose.msra.mxu0 0.0
        %231 = vmatprep.subr.mxu0 0.0
        %232 = vmatpush1.xpose.msra.mxu0 0.0
        %233 = vmatprep.subr.mxu0 0.0
        %234 = vmatpush1.xpose.msra.mxu0 0.0
        %235 = vmatprep.subr.mxu0 0.0
        %236 = vmatpush1.xpose.msra.mxu0 0.0
        %237 = vmatprep.subr.mxu0 0.0
        %238 = vmatpush1.xpose.msra.mxu0 0.0
        %239 = vmatprep.subr.mxu0 0.0
        %240 = vmatpush1.xpose.msra.mxu0 0.0
        %241 = vmatprep.subr.mxu0 0.0
        %242 = vmatpush1.xpose.msra.mxu0 0.0
        %243 = vmatprep.subr.mxu0 0.0
        %244 = vmatpush1.xpose.msra.mxu0 0.0
        %245 = vmatprep.subr.mxu0 0.0
        %246 = vmatpush1.xpose.msra.mxu0 0.0
        %247 = vmatprep.subr.mxu0 0.0
        %248 = vmatpush1.xpose.msra.mxu0 0.0
        %249 = vmatprep.subr.mxu0 0.0
        %250 = vmatpush1.xpose.msra.mxu0 0.0
        %251 = vmatprep.subr.mxu0 0.0
        %252 = vmatpush1.xpose.msra.mxu0 0.0
        %253 = vmatprep.subr.mxu0 0.0
        %254 = vmatpush1.xpose.msra.mxu0 0.0
        %255 = vmatprep.subr.mxu0 0.0
        %256 = vmatpush1.xpose.msra.mxu0 0.0
        %257 = vmatprep.subr.mxu0 0.0
        %258 = vmatpush1.xpose.msra.mxu0 0.0
        %259 = vmatprep.subr.mxu0 0.0
        %260 = vmatpush1.xpose.msra.mxu0 0.0
        %261 = vmatprep.subr.mxu0 0.0
        %262 = vmatpush1.xpose.msra.mxu0 0.0
        %263 = vmatprep.subr.mxu0 0.0
        %264 = vmatpush1.xpose.msra.mxu0 0.0
        %265 = vmatprep.subr.mxu0 0.0
        %266 = vmatpush1.xpose.msra.mxu0 0.0
        %267 = vmatprep.subr.mxu0 0.0
        %268 = vmatpush1.xpose.msra.mxu0 0.0
        %269 = vmatprep.subr.mxu0 0.0
        %270 = vmatpush1.xpose.msra.mxu0 0.0
        %271 = vmatprep.subr.mxu0 0.0
        %272 = vmatpush1.xpose.msra.mxu0 0.0
        %273 = vmatprep.subr.mxu0 0.0
        %274 = vmatpush1.xpose.msra.mxu0 0.0
        %275 = vmatprep.subr.mxu0 0.0
        %276 = vmatpush1.xpose.msra.mxu0 0.0
        %277 = vmatprep.subr.mxu0 0.0
        %278 = vmatpush1.xpose.msra.mxu0 0.0
        %279 = vmatprep.subr.mxu0 0.0
        %280 = vmatpush1.xpose.msra.mxu0 0.0
        %281 = vmatprep.subr.mxu0 0.0
        %282 = vmatpush1.xpose.msra.mxu0 0.0
        %283 = vmatprep.subr.mxu0 0.0
        %284 = vmatpush1.xpose.msra.mxu0 0.0
        %285 = vmatprep.subr.mxu0 0.0
        %286 = vmatpush1.xpose.msra.mxu0 0.0
        %287 = vmatprep.mubr.f32.mxu0 %v221
        %288 = vmatmul.mubr.f32.gmra.mrb[0].mxu0 %v213
        %v289 = vpop.f32.mrb[0].mxu0
        %v290 = vadd.f32 0.0, %v289
        %v291 = vpop.f32.mrb[0].mxu0
        %292 = vdwg.mxu0
        %v293 = vld [vmem:[%s183] sm:$0xf]
        %v294 = vadd.f32 %v293, %v290
        %vm295 = vcmask 27648
        %296 = vst.msk [vmem:[%s183] sm:$0xf] %vm295, %v294
        %s297 = sand.u32 %s92, 1
        %s298 = scalar_lea.sflag [#allocation3], %s297
        %s299 = sand.u32 %s92, 1
        %s300 = smul.addr %s299, 4
        %s301 = scalar_lea.vmem [#allocation2], %s300
        // Predicated region
        $region33: #{tpu_custom_call.1} parent=27 // pred_check
          %p302 = pneg %p102
        $region34: #{tpu_custom_call.1} parent=27 // pred_check_branch
          %304 = sbr.rel (%p302) target = $region36
        $region35: #{tpu_custom_call.1} parent=27 // pred_region
          %s306 = ssub.s32 64, 64
          %307 = vsyncadd %s298, %s306
          %s308 = smul.addr %s20, 64
          %s309 = scalar_lea.hbm %s2, %s308
          %s311 = sshll.u32 %s301, 4
          %s312 = int_to_ptr.vmem [resolvable:$true] %s311
          %314 = dma.vmem_to_hbm [thread:$0]  %s312, 64, %s309, %s298
        $region36: #{tpu_custom_call.1} parent=27 // pred_fallthru
          _
      $region28: #{tpu_custom_call.1} parent=5 // pred_fallthru
        _
      %p315 = scmp.le.s32.totalorder 2, %s11
      // Predicated region
      $region37: #{tpu_custom_call.1} parent=5 // pred_check
        %p316 = pneg %p315
      $region38: #{tpu_custom_call.1} parent=5 // pred_check_branch
        %318 = sbr.rel (%p316) target = $region40
      $region39: #{tpu_custom_call.1} parent=5 // pred_region
        %s319 = ssub.s32 %s11, 2
        // Predicated region
        $region41: #{tpu_custom_call.1} parent=39 // pred_check
          %p320 = pneg %p108
        $region42: #{tpu_custom_call.1} parent=39 // pred_check_branch
          %322 = sbr.rel (%p320) target = $region44
        $region43: #{tpu_custom_call.1} parent=39 // pred_region
          %s323 = sand.u32 %s93, 1
          %s324 = scalar_lea.sflag [#allocation3], %s323
          %s325 = sand.u32 %s93, 1
          %s326 = smul.addr %s325, 4
          %s327 = scalar_lea.vmem [#allocation2], %s326
          %328 = dma.done %s324, 64
        $region44: #{tpu_custom_call.1} parent=39 // pred_fallthru
          _
      $region40: #{tpu_custom_call.1} parent=5 // pred_fallthru
        _
    $region6: #{tpu_custom_call.1} parent=1 // loop_footer
      %s15 = sadd.s32 1, %s11
    $region7: #{tpu_custom_call.1} parent=1 // loop_footer_branch
      %10 = sbr.rel target = $region3
    $region8: #{tpu_custom_call.1} parent=1 // loop_exit
      _
    %329 = vsyncpa [#allocation3], 1
    %s330 = scalar_lea.sflag [#allocation3], 1
    %331 = vsyncpa %s330, 1

</llo_original>
